<compile_context>
chip_gen: v6e
topology: v6e:2x2x1
jax: 0.10.0
libtpu: 0.0.40
codegen_flags: <defaults>
</compile_context>

<pallas_src>
import numpy as np
import jax
import jax.numpy as jnp
from jax.experimental import pallas as pl
from jax.experimental.pallas import tpu as pltpu


# --------------------------------------------------------------------------- #
# Kernel
# --------------------------------------------------------------------------- #
def critic_kernel(xrep_ref, wb_ref, wm_ref, tail_ref, out_ref):
    # xrep_ref : (B, K) f32      -- 26 input scalars lane-replicated 64x (k = j*F + f)
    # wb_ref   : (2, K) f32      -- row 0: per-split weights flat, row 1: biases flat
    # wm_ref   : (K, F) f32/bf16 -- merge weight, rows permuted to k = j*F + f order
    # tail_ref : (3, F) f32      -- [merge bias ; val_head weight ; val_head bias (lane 0)]
    # out_ref  : (B, 1) f32

    # All 7 splits (fc1/fc2/conv3/conv4/conv5/fc6/fc7) as ONE VPU FMA + relu.
    merged = jnp.maximum(
        xrep_ref[...] * wb_ref[0:1, :] + wb_ref[1:2, :], 0.0)       # (B, K)

    # merge_critic: single K=1664 contraction, canonical (M,K)@(K,N) orientation
    # (no transposed operand -> no in-kernel relayout).
    pre = jnp.dot(merged.astype(wm_ref.dtype), wm_ref[...],
                  preferred_element_type=jnp.float32)               # (B, F)
    h = jnp.maximum(pre + tail_ref[0:1, :], 0.0)                    # + merge bias, relu

    # val_head as a lane reduction (avoids an N=1 MXU matmul at the tail).
    val = jnp.sum(h * tail_ref[1:2, :], axis=-1, keepdims=True) + tail_ref[2:3, 0:1]
    out_ref[...] = val.astype(out_ref.dtype)


# --------------------------------------------------------------------------- #
# One-time parameter packing (hoisted out of the per-call path)
# --------------------------------------------------------------------------- #
def pack_critic_params(params, state_dim, action_dim, merge_dtype=jnp.bfloat16):
    """Re-lay-out the Critic parameters once, at load time.

    Column order j = [fc1, fc2, conv3 t=0..S-1, conv4 t=0..S-1,
                      conv5 t=0..Ad-1, fc6, fc7]; k = j*F + f.
    """
    S, Ad = state_dim, action_dim
    F = params["bm"].shape[0]
    T = 4 + 2 * S + Ad
    K = T * F

    def tile(v, n):
        return jnp.broadcast_to(v[None, :], (n, F))

    w_cols = jnp.concatenate(
        [params["w1"][None], params["w2"][None],
         tile(params["w3"], S), tile(params["w4"], S), tile(params["w5"], Ad),
         params["w6"][None], params["w7"][None]], axis=0)            # (T, F)
    b_cols = jnp.concatenate(
        [params["b1"][None], params["b2"][None],
         tile(params["b3"], S), tile(params["b4"], S), tile(params["b5"], Ad),
         params["b6"][None], params["b7"][None]], axis=0)            # (T, F)

    # Per-split weights/biases flattened to k = j*F + f, kept in f32 (biases
    # must stay f32: they set the ReLU thresholds).
    wb = jnp.stack([w_cols.reshape(K), b_cols.reshape(K)], axis=0).astype(jnp.float32)

    # Merge weight: permute rows from torch's concat/flatten order (conv blocks
    # flattened f-major: f*n_t + t) to the kernel's k = j*F + f (t-major) order.
    # Keep the canonical (K, F) orientation for a transpose-free MXU lowering.
    wm = params["wm"]                                                 # (K, F), x @ wm layout
    o = 0
    pieces = []

    def take(n):
        nonlocal o
        p = wm[o:o + n]
        o += n
        return p

    pieces.append(take(F))                                            # fc1
    pieces.append(take(F))                                            # fc2
    for n_t in (S, S, Ad):                                            # conv3, conv4, conv5
        blk = take(F * n_t)                                           # rows: f*n_t + t
        pieces.append(blk.reshape(F, n_t, F).transpose(1, 0, 2).reshape(n_t * F, F))
    pieces.append(take(F))                                            # fc6
    pieces.append(take(F))                                            # fc7
    assert o == wm.shape[0]
    wm_perm = jnp.concatenate(pieces, axis=0)                         # (K, F)
    wm_packed = wm_perm.astype(merge_dtype)                           # bf16 by default

    bv_row = jnp.zeros((F,), jnp.float32).at[0].set(params["bv"].reshape(()))
    tail = jnp.stack([params["bm"], params["wv"], bv_row], axis=0).astype(jnp.float32)

    return {"wb": wb, "wm": wm_packed, "tail": tail}


# --------------------------------------------------------------------------- #
# Per-call forward (jitted; tiny input prep fused into the pallas operand)
# --------------------------------------------------------------------------- #
@jax.jit
def critic_forward(x, packed):
    """x: (B, 7, S) float32.  packed: output of pack_critic_params.  -> (B, 1)."""
    B, C, S = x.shape
    K = packed["wb"].shape[1]
    F = packed["tail"].shape[1]
    T = K // F
    a_dim = T - 4 - 2 * S

    last = x[:, :, -1]                                               # (B, 7)
    xc = jnp.concatenate(
        [last[:, 0:2],                 # fc1, fc2 inputs (last time step)
         x[:, 2, :],                   # conv3 input, all S steps
         x[:, 3, :],                   # conv4 input, all S steps
         x[:, 4, :a_dim],              # conv5 input, first a_dim steps
         last[:, 5:7]],                # fc6, fc7 inputs (last time step)
        axis=1)                                                      # (B, T)
    xrep = jnp.repeat(xc, F, axis=1).astype(jnp.float32)             # (B, K), k = j*F + f

    vmem = pl.BlockSpec(memory_space=pltpu.MemorySpace.VMEM)
    return pl.pallas_call(
        critic_kernel,
        out_shape=jax.ShapeDtypeStruct((B, 1), jnp.float32),
        in_specs=[vmem, vmem, vmem, vmem],
        out_specs=vmem,
        compiler_params=pltpu.CompilerParams(
            # Let XLA fuse the xrep prep fusion into the custom-call operand
            # instead of a standalone fusion + HBM round trip.
            allow_input_fusion=[True, False, False, False]),
    )(xrep, packed["wb"], packed["wm"], packed["tail"])


# --------------------------------------------------------------------------- #
# Pure-JAX mirror of the PyTorch forward (for verification)
# --------------------------------------------------------------------------- #
def critic_reference(x, params, a_dim):
    B = x.shape[0]
    last = x[:, :, -1]
    relu = lambda v: jnp.maximum(v, 0.0)
    hi = jax.lax.Precision.HIGHEST

    def lin(v, w, b):                                   # v (B,1)
        return relu(v * w[None, :] + b[None, :])

    def conv(v, w, b):                                  # v (B, T)
        out = v[:, None, :] * w[None, :, None] + b[None, :, None]   # (B, F, T)
        return relu(out).reshape(B, -1)

    s1 = lin(last[:, 0:1], params["w1"], params["b1"])
    s2 = lin(last[:, 1:2], params["w2"], params["b2"])
    s3 = conv(x[:, 2, :], params["w3"], params["b3"])
    s4 = conv(x[:, 3, :], params["w4"], params["b4"])
    s5 = conv(x[:, 4, :a_dim], params["w5"], params["b5"])
    s6 = lin(last[:, 5:6], params["w6"], params["b6"])
    s7 = lin(last[:, 6:7], params["w7"], params["b7"])
    merged = jnp.concatenate([s1, s2, s3, s4, s5, s6, s7], axis=1)   # (B, 1664)
    h = relu(jnp.dot(merged, params["wm"], precision=hi) + params["bm"][None, :])
    return jnp.dot(h, params["wv"].reshape(-1, 1), precision=hi) + params["bv"].reshape(1, 1)


# --------------------------------------------------------------------------- #
if __name__ == "__main__":
    # merge_critic = Linear(1664, F):  1664 = F * (4 + 2*S + a_dim)
    #   -> F = 64, S = state_dim = 8, a_dim = 6
    state_dim, action_dim, feature_num = 8, 6, 64
    B, C, S, F = 2, 7, state_dim, feature_num
    merge_in = F * (4 + 2 * S + action_dim)
    assert merge_in == 1664

    key = jax.random.PRNGKey(0)
    ks = jax.random.split(key, 20)

    def nrm(k, shape, scale=0.1):
        return (scale * jax.random.normal(k, shape)).astype(jnp.float32)

    # torch Linear/Conv1d weights with in-features / in-channels = 1 collapse to (F,).
    params = {
        "w1": nrm(ks[0], (F,)), "b1": nrm(ks[1], (F,)),
        "w2": nrm(ks[2], (F,)), "b2": nrm(ks[3], (F,)),
        "w3": nrm(ks[4], (F,)), "b3": nrm(ks[5], (F,)),
        "w4": nrm(ks[6], (F,)), "b4": nrm(ks[7], (F,)),
        "w5": nrm(ks[8], (F,)), "b5": nrm(ks[9], (F,)),
        "w6": nrm(ks[10], (F,)), "b6": nrm(ks[11], (F,)),
        "w7": nrm(ks[12], (F,)), "b7": nrm(ks[13], (F,)),
        "wm": nrm(ks[14], (merge_in, F), scale=0.05),   # already W.T layout (x @ wm)
        "bm": nrm(ks[15], (F,)),
        "wv": nrm(ks[16], (F,)),
        "bv": nrm(ks[17], (1,)),
    }
    x = nrm(ks[18], (B, C, S), scale=1.0)

    ref = jax.block_until_ready(critic_reference(x, params, action_dim))

    # Default path: bf16 merge weight (weight + activation quantized to bf16
    # for the K=1664 contraction; accumulate in f32).
    packed = jax.tree_util.tree_map(
        jax.block_until_ready, pack_critic_params(params, state_dim, action_dim))
    out = jax.block_until_ready(critic_forward(x, packed))
    assert out.shape == (B, 1)
    np.testing.assert_allclose(np.asarray(out), np.asarray(ref), rtol=2e-2, atol=2e-2)

    # Full-f32 merge path (tight tolerance check against the reference).
    packed_f32 = jax.tree_util.tree_map(
        jax.block_until_ready,
        pack_critic_params(params, state_dim, action_dim, merge_dtype=jnp.float32))
    out_f32 = jax.block_until_ready(critic_forward(x, packed_f32))
    np.testing.assert_allclose(np.asarray(out_f32), np.asarray(ref), rtol=1e-4, atol=1e-4)

    print("KERNEL_OK")
</pallas_src>

<mosaic_0001>
module attributes {stable_mosaic.version = 11 : i64} {
  func.func @critic_kernel(%arg0: memref<2x1664xf32, #tpu.memory_space<vmem>>, %arg1: memref<2x1664xf32, #tpu.memory_space<vmem>>, %arg2: memref<1664x64xbf16, #tpu.memory_space<vmem>>, %arg3: memref<3x64xf32, #tpu.memory_space<vmem>>, %arg4: memref<2x1xf32, #tpu.memory_space<vmem>>) attributes {dimension_semantics = [], scalar_prefetch = 0 : i64, scratch_operands = 0 : i64, tpu.core_type = #tpu.core_type<tc>} {
    %c0 = arith.constant 0 : index
    %c0_0 = arith.constant 0 : index
    %0 = vector.load %arg0[%c0, %c0_0] : memref<2x1664xf32, #tpu.memory_space<vmem>>, vector<2x1664xf32>
    %c0_1 = arith.constant 0 : index
    %c0_2 = arith.constant 0 : index
    %1 = vector.load %arg1[%c0_1, %c0_2] : memref<2x1664xf32, #tpu.memory_space<vmem>>, vector<1x1664xf32>
    %2 = vector.broadcast %1 : vector<1x1664xf32> to vector<2x1664xf32>
    %3 = arith.mulf %0, %2 : vector<2x1664xf32>
    %c1 = arith.constant 1 : index
    %c0_3 = arith.constant 0 : index
    %4 = vector.load %arg1[%c1, %c0_3] : memref<2x1664xf32, #tpu.memory_space<vmem>>, vector<1x1664xf32>
    %5 = vector.broadcast %4 : vector<1x1664xf32> to vector<2x1664xf32>
    %6 = arith.addf %3, %5 : vector<2x1664xf32>
    %cst = arith.constant 0.000000e+00 : f32
    %7 = vector.broadcast %cst : f32 to vector<2x1664xf32>
    %8 = arith.maximumf %6, %7 : vector<2x1664xf32>
    %9 = arith.truncf %8 : vector<2x1664xf32> to vector<2x1664xbf16>
    %c0_4 = arith.constant 0 : index
    %c0_5 = arith.constant 0 : index
    %10 = vector.load %arg2[%c0_4, %c0_5] : memref<1664x64xbf16, #tpu.memory_space<vmem>>, vector<1664x64xbf16>
    %cst_6 = arith.constant dense<0.000000e+00> : vector<2x64xf32>
    %11 = tpu.matmul %9, %10, %cst_6 {dimension_numbers = #tpu.dot_dimension_numbers<[1], [0], [0], [1], [0, 0, 1, 1], [], []>} : vector<2x1664xbf16>, vector<1664x64xbf16>, vector<2x64xf32> -> vector<2x64xf32>
    %c0_7 = arith.constant 0 : index
    %c0_8 = arith.constant 0 : index
    %12 = vector.load %arg3[%c0_7, %c0_8] : memref<3x64xf32, #tpu.memory_space<vmem>>, vector<1x64xf32>
    %13 = vector.broadcast %12 : vector<1x64xf32> to vector<2x64xf32>
    %14 = arith.addf %11, %13 : vector<2x64xf32>
    %cst_9 = arith.constant 0.000000e+00 : f32
    %15 = vector.broadcast %cst_9 : f32 to vector<2x64xf32>
    %16 = arith.maximumf %14, %15 : vector<2x64xf32>
    %c1_10 = arith.constant 1 : index
    %c0_11 = arith.constant 0 : index
    %17 = vector.load %arg3[%c1_10, %c0_11] : memref<3x64xf32, #tpu.memory_space<vmem>>, vector<1x64xf32>
    %18 = vector.broadcast %17 : vector<1x64xf32> to vector<2x64xf32>
    %19 = arith.mulf %16, %18 : vector<2x64xf32>
    %cst_12 = arith.constant dense<0.000000e+00> : vector<2xf32>
    %20 = vector.multi_reduction <add>, %19, %cst_12 [1] : vector<2x64xf32> to vector<2xf32>
    %21 = vector.shape_cast %20 : vector<2xf32> to vector<2x1xf32>
    %c2 = arith.constant 2 : index
    %c0_13 = arith.constant 0 : index
    %22 = vector.load %arg3[%c2, %c0_13] : memref<3x64xf32, #tpu.memory_space<vmem>>, vector<1x1xf32>
    %23 = vector.broadcast %22 : vector<1x1xf32> to vector<2x1xf32>
    %24 = arith.addf %21, %23 : vector<2x1xf32>
    %c0_14 = arith.constant 0 : index
    %c0_15 = arith.constant 0 : index
    %25 = vector.load %arg4[%c0_14, %c0_15] : memref<2x1xf32, #tpu.memory_space<vmem>>, vector<2x1xf32>
    tpu.vector_store %arg4[%c0_14, %c0_15], %24 {strides = array<i32>} : memref<2x1xf32, #tpu.memory_space<vmem>>, vector<2x1xf32>,
    return
  }
}

</mosaic_0001>

<llo_original>
// kernel: critic_forward.1
$region0: #{critic_forward.1}
  #allocation0 [shape = 'u32[]', space=smem, size = 0x4, offset = 0x4, fixed_abs, tag = 'smem constant byte address 0x4 - core index']
  #allocation1 [shape = 'u32[144,128]{1,0:T(1,128)}', space=vmem, size = 0x12000, scoped, tag = 'internal scratch']
  %s0 = inlined_call_operand.vmem [shape: f32[2,1664], index: 0, kind: input, shape index: {}]
  %s1 = inlined_call_operand.vmem [shape: f32[2,1664], index: 1, kind: input, shape index: {}]
  %s2 = inlined_call_operand.vmem [shape: bf16[1664,64], index: 2, kind: input, shape index: {}]
  %s3 = inlined_call_operand.vmem [shape: f32[3,64], index: 3, kind: input, shape index: {}]
  %s4 = inlined_call_operand.vmem [shape: f32[2,1], index: 4, kind: output, shape index: {}]
  %s5 = sld [smem:[#allocation0]]
  $region26: #{critic_forward.1} parent=0
    _
  %s7 = ssub.s32 1, %s5
  %s8 = scalar_select 0, %s7, %s5
  // Predicated region
  $region2: #{critic_forward.1} parent=0 // pred_check
    _
  $region3: #{critic_forward.1} parent=0 // pred_check_branch
    %10 = sbr.rel (0) target = $region5
  $region4: #{critic_forward.1} parent=0 // pred_region
    _
  $region5: #{critic_forward.1} parent=0 // pred_fallthru
    _
  // Predicated region
  $region6: #{critic_forward.1} parent=0 // pred_check
    _
  $region7: #{critic_forward.1} parent=0 // pred_check_branch
    %12 = sbr.rel (0) target = $region9
  $region8: #{critic_forward.1} parent=0 // pred_region
    _
  $region9: #{critic_forward.1} parent=0 // pred_fallthru
    _
  // Predicated region
  $region10: #{critic_forward.1} parent=0 // pred_check
    _
  $region11: #{critic_forward.1} parent=0 // pred_check_branch
    %14 = sbr.rel (0) target = $region13
  $region12: #{critic_forward.1} parent=0 // pred_region
    _
  $region13: #{critic_forward.1} parent=0 // pred_fallthru
    _
  // Predicated region
  $region14: #{critic_forward.1} parent=0 // pred_check
    _
  $region15: #{critic_forward.1} parent=0 // pred_check_branch
    %16 = sbr.rel (0) target = $region17
  $region16: #{critic_forward.1} parent=0 // pred_region
    _
  $region17: #{critic_forward.1} parent=0 // pred_fallthru
    _
  %v18 = vld [vmem:[%s0] sm:$0xff]
  %v19 = vld [vmem:[%s0 + $0x8] sm:$0xff]
  %v20 = vld [vmem:[%s0 + $0x10] sm:$0xff]
  %v21 = vld [vmem:[%s0 + $0x18] sm:$0x3]
  %v22 = vld [vmem:[%s1] ss:$2 sm:$0xff]
  %s23 = scalar_lea.vmem %s1, 16
  %v24 = vld [vmem:[%s23] ss:$2 sm:$0x1f]
  %v27 = vlaneseq
  %v28 = vshrl.u32 %v27, 7
  %v29 = vsub.s32 0, %v28
  %v30 = vrot.slane %v22, %v29
  %v31 = vlaneseq
  %v32 = vshrl.u32 %v31, 7
  %v33 = vsub.s32 1, %v32
  %v34 = vrot.slane %v22, %v33
  %v35 = vlaneseq
  %v36 = vshrl.u32 %v35, 7
  %v37 = vsub.s32 2, %v36
  %v38 = vrot.slane %v22, %v37
  %v39 = vlaneseq
  %v40 = vshrl.u32 %v39, 7
  %v41 = vsub.s32 3, %v40
  %v42 = vrot.slane %v22, %v41
  %v43 = vlaneseq
  %v44 = vshrl.u32 %v43, 7
  %v45 = vsub.s32 4, %v44
  %v46 = vrot.slane %v22, %v45
  %v47 = vlaneseq
  %v48 = vshrl.u32 %v47, 7
  %v49 = vsub.s32 5, %v48
  %v50 = vrot.slane %v22, %v49
  %v51 = vlaneseq
  %v52 = vshrl.u32 %v51, 7
  %v53 = vsub.s32 6, %v52
  %v54 = vrot.slane %v22, %v53
  %v55 = vlaneseq
  %v56 = vshrl.u32 %v55, 7
  %v57 = vsub.s32 7, %v56
  %v58 = vrot.slane %v22, %v57
  %v59 = vlaneseq
  %v60 = vshrl.u32 %v59, 7
  %v61 = vsub.s32 0, %v60
  %v62 = vrot.slane %v24, %v61
  %v63 = vlaneseq
  %v64 = vshrl.u32 %v63, 7
  %v65 = vsub.s32 1, %v64
  %v66 = vrot.slane %v24, %v65
  %v67 = vlaneseq
  %v68 = vshrl.u32 %v67, 7
  %v69 = vsub.s32 2, %v68
  %v70 = vrot.slane %v24, %v69
  %v71 = vlaneseq
  %v72 = vshrl.u32 %v71, 7
  %v73 = vsub.s32 3, %v72
  %v74 = vrot.slane %v24, %v73
  %v75 = vlaneseq
  %v76 = vshrl.u32 %v75, 7
  %v77 = vsub.s32 4, %v76
  %v78 = vrot.slane %v24, %v77
  %v79 = vcombine.low %v30, %v34
  %v80 = vcombine.low %v38, %v42
  %v82 = vunpack.c.l.s4 1983009808
  %v83 = vunpack.c.0.s8 %v82
  %v84 = vlaneseq
  %v85 = vshrl.u32 %v84, 7
  %v86 = vsub.s32 %v83, %v85
  %v87 = vrot.slane %v79, %v86
  %v89 = vunpack.c.l.s4 1983009808
  %v90 = vunpack.c.0.s8 %v89
  %v91 = vlaneseq
  %v92 = vshrl.u32 %v91, 7
  %v93 = vsub.s32 %v90, %v92
  %v94 = vrot.slane %v80, %v93
  %v95 = vcombine.low %v87, %v94
  %v96 = vcombine.low %v46, %v50
  %v97 = vcombine.low %v54, %v58
  %v99 = vunpack.c.l.s4 1983009808
  %v100 = vunpack.c.0.s8 %v99
  %v101 = vlaneseq
  %v102 = vshrl.u32 %v101, 7
  %v103 = vsub.s32 %v100, %v102
  %v104 = vrot.slane %v96, %v103
  %v106 = vunpack.c.l.s4 1983009808
  %v107 = vunpack.c.0.s8 %v106
  %v108 = vlaneseq
  %v109 = vshrl.u32 %v108, 7
  %v110 = vsub.s32 %v107, %v109
  %v111 = vrot.slane %v97, %v110
  %v112 = vcombine.low %v104, %v111
  %v113 = vcombine.low %v62, %v66
  %v114 = vcombine.low %v70, %v74
  %v116 = vunpack.c.l.s4 1983009808
  %v117 = vunpack.c.0.s8 %v116
  %v118 = vlaneseq
  %v119 = vshrl.u32 %v118, 7
  %v120 = vsub.s32 %v117, %v119
  %v121 = vrot.slane %v113, %v120
  %v123 = vunpack.c.l.s4 1983009808
  %v124 = vunpack.c.0.s8 %v123
  %v125 = vlaneseq
  %v126 = vshrl.u32 %v125, 7
  %v127 = vsub.s32 %v124, %v126
  %v128 = vrot.slane %v114, %v127
  %v129 = vcombine.low %v121, %v128
  %v131 = vunpack.c.l.s4 1983009808
  %v132 = vunpack.c.0.s8 %v131
  %v133 = vlaneseq
  %v134 = vshrl.u32 %v133, 7
  %v135 = vsub.s32 %v132, %v134
  %v136 = vrot.slane %v78, %v135
  %v141 = vmul.f32 %v18, %v95
  %v142 = vmul.f32 %v19, %v112
  %v143 = vmul.f32 %v20, %v129
  %v144 = vmul.f32 %v21, %v136
  %s145 = scalar_lea.vmem %s1, 1
  %v146 = vld [vmem:[%s145] ss:$2 sm:$0xff]
  %s147 = scalar_lea.vmem %s1, 17
  %v148 = vld [vmem:[%s147] ss:$2 sm:$0x1f]
  %v151 = vlaneseq
  %v152 = vshrl.u32 %v151, 7
  %v153 = vsub.s32 0, %v152
  %v154 = vrot.slane %v146, %v153
  %v155 = vlaneseq
  %v156 = vshrl.u32 %v155, 7
  %v157 = vsub.s32 1, %v156
  %v158 = vrot.slane %v146, %v157
  %v159 = vlaneseq
  %v160 = vshrl.u32 %v159, 7
  %v161 = vsub.s32 2, %v160
  %v162 = vrot.slane %v146, %v161
  %v163 = vlaneseq
  %v164 = vshrl.u32 %v163, 7
  %v165 = vsub.s32 3, %v164
  %v166 = vrot.slane %v146, %v165
  %v167 = vlaneseq
  %v168 = vshrl.u32 %v167, 7
  %v169 = vsub.s32 4, %v168
  %v170 = vrot.slane %v146, %v169
  %v171 = vlaneseq
  %v172 = vshrl.u32 %v171, 7
  %v173 = vsub.s32 5, %v172
  %v174 = vrot.slane %v146, %v173
  %v175 = vlaneseq
  %v176 = vshrl.u32 %v175, 7
  %v177 = vsub.s32 6, %v176
  %v178 = vrot.slane %v146, %v177
  %v179 = vlaneseq
  %v180 = vshrl.u32 %v179, 7
  %v181 = vsub.s32 7, %v180
  %v182 = vrot.slane %v146, %v181
  %v183 = vlaneseq
  %v184 = vshrl.u32 %v183, 7
  %v185 = vsub.s32 0, %v184
  %v186 = vrot.slane %v148, %v185
  %v187 = vlaneseq
  %v188 = vshrl.u32 %v187, 7
  %v189 = vsub.s32 1, %v188
  %v190 = vrot.slane %v148, %v189
  %v191 = vlaneseq
  %v192 = vshrl.u32 %v191, 7
  %v193 = vsub.s32 2, %v192
  %v194 = vrot.slane %v148, %v193
  %v195 = vlaneseq
  %v196 = vshrl.u32 %v195, 7
  %v197 = vsub.s32 3, %v196
  %v198 = vrot.slane %v148, %v197
  %v199 = vlaneseq
  %v200 = vshrl.u32 %v199, 7
  %v201 = vsub.s32 4, %v200
  %v202 = vrot.slane %v148, %v201
  %v203 = vcombine.low %v154, %v158
  %v204 = vcombine.low %v162, %v166
  %v206 = vunpack.c.l.s4 1983009808
  %v207 = vunpack.c.0.s8 %v206
  %v208 = vlaneseq
  %v209 = vshrl.u32 %v208, 7
  %v210 = vsub.s32 %v207, %v209
  %v211 = vrot.slane %v203, %v210
  %v213 = vunpack.c.l.s4 1983009808
  %v214 = vunpack.c.0.s8 %v213
  %v215 = vlaneseq
  %v216 = vshrl.u32 %v215, 7
  %v217 = vsub.s32 %v214, %v216
  %v218 = vrot.slane %v204, %v217
  %v219 = vcombine.low %v211, %v218
  %v220 = vcombine.low %v170, %v174
  %v221 = vcombine.low %v178, %v182
  %v223 = vunpack.c.l.s4 1983009808
  %v224 = vunpack.c.0.s8 %v223
  %v225 = vlaneseq
  %v226 = vshrl.u32 %v225, 7
  %v227 = vsub.s32 %v224, %v226
  %v228 = vrot.slane %v220, %v227
  %v230 = vunpack.c.l.s4 1983009808
  %v231 = vunpack.c.0.s8 %v230
  %v232 = vlaneseq
  %v233 = vshrl.u32 %v232, 7
  %v234 = vsub.s32 %v231, %v233
  %v235 = vrot.slane %v221, %v234
  %v236 = vcombine.low %v228, %v235
  %v237 = vcombine.low %v186, %v190
  %v238 = vcombine.low %v194, %v198
  %v240 = vunpack.c.l.s4 1983009808
  %v241 = vunpack.c.0.s8 %v240
  %v242 = vlaneseq
  %v243 = vshrl.u32 %v242, 7
  %v244 = vsub.s32 %v241, %v243
  %v245 = vrot.slane %v237, %v244
  %v247 = vunpack.c.l.s4 1983009808
  %v248 = vunpack.c.0.s8 %v247
  %v249 = vlaneseq
  %v250 = vshrl.u32 %v249, 7
  %v251 = vsub.s32 %v248, %v250
  %v252 = vrot.slane %v238, %v251
  %v253 = vcombine.low %v245, %v252
  %v255 = vunpack.c.l.s4 1983009808
  %v256 = vunpack.c.0.s8 %v255
  %v257 = vlaneseq
  %v258 = vshrl.u32 %v257, 7
  %v259 = vsub.s32 %v256, %v258
  %v260 = vrot.slane %v202, %v259
  %v265 = vadd.f32 %v141, %v219
  %v266 = vadd.f32 %v142, %v236
  %v267 = vadd.f32 %v143, %v253
  %v268 = vadd.f32 %v144, %v260
  %v269 = vmax.f32 %v265, 0.0
  %v270 = vmax.f32 %v266, 0.0
  %v271 = vmax.f32 %v267, 0.0
  %v272 = vmax.f32 %v268, 0.0
  %v277 = vcombine.high %v269, %v269
  %v279 = vunpack.c.l.s4 1983009808
  %v280 = vunpack.c.0.s8 %v279
  %v281 = vlaneseq
  %v282 = vshrl.u32 %v281, 7
  %v283 = vsub.s32 %v280, %v282
  %v284 = vrot.slane %v269, %v283
  %v286 = vunpack.c.l.s4 1983009808
  %v287 = vunpack.c.0.s8 %v286
  %v288 = vlaneseq
  %v289 = vshrl.u32 %v288, 7
  %v290 = vsub.s32 %v287, %v289
  %v291 = vrot.slane %v277, %v290
  %v292 = vcombine.high %v284, %v284
  %v293 = vcombine.high %v291, %v291
  %v294 = vcombine.high %v270, %v270
  %v296 = vunpack.c.l.s4 1983009808
  %v297 = vunpack.c.0.s8 %v296
  %v298 = vlaneseq
  %v299 = vshrl.u32 %v298, 7
  %v300 = vsub.s32 %v297, %v299
  %v301 = vrot.slane %v270, %v300
  %v303 = vunpack.c.l.s4 1983009808
  %v304 = vunpack.c.0.s8 %v303
  %v305 = vlaneseq
  %v306 = vshrl.u32 %v305, 7
  %v307 = vsub.s32 %v304, %v306
  %v308 = vrot.slane %v294, %v307
  %v309 = vcombine.high %v301, %v301
  %v310 = vcombine.high %v308, %v308
  %v311 = vcombine.high %v271, %v271
  %v313 = vunpack.c.l.s4 1983009808
  %v314 = vunpack.c.0.s8 %v313
  %v315 = vlaneseq
  %v316 = vshrl.u32 %v315, 7
  %v317 = vsub.s32 %v314, %v316
  %v318 = vrot.slane %v271, %v317
  %v320 = vunpack.c.l.s4 1983009808
  %v321 = vunpack.c.0.s8 %v320
  %v322 = vlaneseq
  %v323 = vshrl.u32 %v322, 7
  %v324 = vsub.s32 %v321, %v323
  %v325 = vrot.slane %v311, %v324
  %v326 = vcombine.high %v318, %v318
  %v327 = vcombine.high %v325, %v325
  %v329 = vunpack.c.l.s4 1983009808
  %v330 = vunpack.c.0.s8 %v329
  %v331 = vlaneseq
  %v332 = vshrl.u32 %v331, 7
  %v333 = vsub.s32 %v330, %v332
  %v334 = vrot.slane %v272, %v333
  %v348 = vpack.c.bf16 %v284, %v284
  %v349 = vpack.c.bf16 %v292, %v292
  %v350 = vpack.c.bf16 %v291, %v291
  %v351 = vpack.c.bf16 %v293, %v293
  %v352 = vpack.c.bf16 %v301, %v301
  %v353 = vpack.c.bf16 %v309, %v309
  %v354 = vpack.c.bf16 %v308, %v308
  %v355 = vpack.c.bf16 %v310, %v310
  %v356 = vpack.c.bf16 %v318, %v318
  %v357 = vpack.c.bf16 %v326, %v326
  %v358 = vpack.c.bf16 %v325, %v325
  %v359 = vpack.c.bf16 %v327, %v327
  %v360 = vpack.c.bf16 %v334, %v334
  %v361 = vld [vmem:[%s2] sm:$0xf]
  %v362 = vld [vmem:[%s2 + $0x4] sm:$0xf]
  %v363 = vld [vmem:[%s2 + $0x8] sm:$0xf]
  %v364 = vld [vmem:[%s2 + $0xc] sm:$0xf]
  %v365 = vld [vmem:[%s2 + $0x10] sm:$0xf]
  %v366 = vld [vmem:[%s2 + $0x14] sm:$0xf]
  %v367 = vld [vmem:[%s2 + $0x18] sm:$0xf]
  %v368 = vld [vmem:[%s2 + $0x1c] sm:$0xf]
  %v369 = vld [vmem:[%s2 + $0x20] sm:$0xf]
  %v370 = vld [vmem:[%s2 + $0x24] sm:$0xf]
  %v371 = vld [vmem:[%s2 + $0x28] sm:$0xf]
  %v372 = vld [vmem:[%s2 + $0x2c] sm:$0xf]
  %v373 = vld [vmem:[%s2 + $0x30] sm:$0xf]
  %v374 = vld [vmem:[%s2 + $0x34] sm:$0xf]
  %v375 = vld [vmem:[%s2 + $0x38] sm:$0xf]
  %v376 = vld [vmem:[%s2 + $0x3c] sm:$0xf]
  %v377 = vld [vmem:[%s2 + $0x40] sm:$0xf]
  %v378 = vld [vmem:[%s2 + $0x44] sm:$0xf]
  %v379 = vld [vmem:[%s2 + $0x48] sm:$0xf]
  %v380 = vld [vmem:[%s2 + $0x4c] sm:$0xf]
  %v381 = vld [vmem:[%s2 + $0x50] sm:$0xf]
  %v382 = vld [vmem:[%s2 + $0x54] sm:$0xf]
  %v383 = vld [vmem:[%s2 + $0x58] sm:$0xf]
  %v384 = vld [vmem:[%s2 + $0x5c] sm:$0xf]
  %v385 = vld [vmem:[%s2 + $0x60] sm:$0xf]
  %v386 = vld [vmem:[%s2 + $0x64] sm:$0xf]
  %v387 = vld [vmem:[%s2 + $0x68] sm:$0xf]
  %v388 = vld [vmem:[%s2 + $0x6c] sm:$0xf]
  %v389 = vld [vmem:[%s2 + $0x70] sm:$0xf]
  %v390 = vld [vmem:[%s2 + $0x74] sm:$0xf]
  %v391 = vld [vmem:[%s2 + $0x78] sm:$0xf]
  %v392 = vld [vmem:[%s2 + $0x7c] sm:$0xf]
  %v393 = vld [vmem:[%s2 + $0x80] sm:$0xf]
  %v394 = vld [vmem:[%s2 + $0x84] sm:$0xf]
  %v395 = vld [vmem:[%s2 + $0x88] sm:$0xf]
  %v396 = vld [vmem:[%s2 + $0x8c] sm:$0xf]
  %v397 = vld [vmem:[%s2 + $0x90] sm:$0xf]
  %v398 = vld [vmem:[%s2 + $0x94] sm:$0xf]
  %v399 = vld [vmem:[%s2 + $0x98] sm:$0xf]
  %v400 = vld [vmem:[%s2 + $0x9c] sm:$0xf]
  %v401 = vld [vmem:[%s2 + $0xa0] sm:$0xf]
  %v402 = vld [vmem:[%s2 + $0xa4] sm:$0xf]
  %v403 = vld [vmem:[%s2 + $0xa8] sm:$0xf]
  %v404 = vld [vmem:[%s2 + $0xac] sm:$0xf]
  %v405 = vld [vmem:[%s2 + $0xb0] sm:$0xf]
  %v406 = vld [vmem:[%s2 + $0xb4] sm:$0xf]
  %v407 = vld [vmem:[%s2 + $0xb8] sm:$0xf]
  %v408 = vld [vmem:[%s2 + $0xbc] sm:$0xf]
  %v409 = vld [vmem:[%s2 + $0xc0] sm:$0xf]
  %v410 = vld [vmem:[%s2 + $0xc4] sm:$0xf]
  %v411 = vld [vmem:[%s2 + $0xc8] sm:$0xf]
  %v412 = vld [vmem:[%s2 + $0xcc] sm:$0xf]
  %v413 = vld [vmem:[%s2 + $0xd0] sm:$0xf]
  %v414 = vld [vmem:[%s2 + $0xd4] sm:$0xf]
  %v415 = vld [vmem:[%s2 + $0xd8] sm:$0xf]
  %v416 = vld [vmem:[%s2 + $0xdc] sm:$0xf]
  %v417 = vld [vmem:[%s2 + $0xe0] sm:$0xf]
  %v418 = vld [vmem:[%s2 + $0xe4] sm:$0xf]
  %v419 = vld [vmem:[%s2 + $0xe8] sm:$0xf]
  %v420 = vld [vmem:[%s2 + $0xec] sm:$0xf]
  %v421 = vld [vmem:[%s2 + $0xf0] sm:$0xf]
  %v422 = vld [vmem:[%s2 + $0xf4] sm:$0xf]
  %v423 = vld [vmem:[%s2 + $0xf8] sm:$0xf]
  %v424 = vld [vmem:[%s2 + $0xfc] sm:$0xf]
  %v425 = vld [vmem:[%s2 + $0x100] sm:$0xf]
  %v426 = vld [vmem:[%s2 + $0x104] sm:$0xf]
  %v427 = vld [vmem:[%s2 + $0x108] sm:$0xf]
  %v428 = vld [vmem:[%s2 + $0x10c] sm:$0xf]
  %v429 = vld [vmem:[%s2 + $0x110] sm:$0xf]
  %v430 = vld [vmem:[%s2 + $0x114] sm:$0xf]
  %v431 = vld [vmem:[%s2 + $0x118] sm:$0xf]
  %v432 = vld [vmem:[%s2 + $0x11c] sm:$0xf]
  %v433 = vld [vmem:[%s2 + $0x120] sm:$0xf]
  %v434 = vld [vmem:[%s2 + $0x124] sm:$0xf]
  %v435 = vld [vmem:[%s2 + $0x128] sm:$0xf]
  %v436 = vld [vmem:[%s2 + $0x12c] sm:$0xf]
  %v437 = vld [vmem:[%s2 + $0x130] sm:$0xf]
  %v438 = vld [vmem:[%s2 + $0x134] sm:$0xf]
  %v439 = vld [vmem:[%s2 + $0x138] sm:$0xf]
  %v440 = vld [vmem:[%s2 + $0x13c] sm:$0xf]
  %v441 = vld [vmem:[%s2 + $0x140] sm:$0xf]
  %v442 = vld [vmem:[%s2 + $0x144] sm:$0xf]
  %v443 = vld [vmem:[%s2 + $0x148] sm:$0xf]
  %v444 = vld [vmem:[%s2 + $0x14c] sm:$0xf]
  %v445 = vld [vmem:[%s2 + $0x150] sm:$0xf]
  %v446 = vld [vmem:[%s2 + $0x154] sm:$0xf]
  %v447 = vld [vmem:[%s2 + $0x158] sm:$0xf]
  %v448 = vld [vmem:[%s2 + $0x15c] sm:$0xf]
  %v449 = vld [vmem:[%s2 + $0x160] sm:$0xf]
  %v450 = vld [vmem:[%s2 + $0x164] sm:$0xf]
  %v451 = vld [vmem:[%s2 + $0x168] sm:$0xf]
  %v452 = vld [vmem:[%s2 + $0x16c] sm:$0xf]
  %v453 = vld [vmem:[%s2 + $0x170] sm:$0xf]
  %v454 = vld [vmem:[%s2 + $0x174] sm:$0xf]
  %v455 = vld [vmem:[%s2 + $0x178] sm:$0xf]
  %v456 = vld [vmem:[%s2 + $0x17c] sm:$0xf]
  %v457 = vld [vmem:[%s2 + $0x180] sm:$0xf]
  %v458 = vld [vmem:[%s2 + $0x184] sm:$0xf]
  %v459 = vld [vmem:[%s2 + $0x188] sm:$0xf]
  %v460 = vld [vmem:[%s2 + $0x18c] sm:$0xf]
  %v461 = vld [vmem:[%s2 + $0x190] sm:$0xf]
  %v462 = vld [vmem:[%s2 + $0x194] sm:$0xf]
  %v463 = vld [vmem:[%s2 + $0x198] sm:$0xf]
  %v464 = vld [vmem:[%s2 + $0x19c] sm:$0xf]
  %v465 = vld [vmem:[%s2 + $0x1a0] sm:$0xf]
  %v466 = vld [vmem:[%s2 + $0x1a4] sm:$0xf]
  %v467 = vld [vmem:[%s2 + $0x1a8] sm:$0xf]
  %v468 = vld [vmem:[%s2 + $0x1ac] sm:$0xf]
  %v469 = vld [vmem:[%s2 + $0x1b0] sm:$0xf]
  %v470 = vld [vmem:[%s2 + $0x1b4] sm:$0xf]
  %v471 = vld [vmem:[%s2 + $0x1b8] sm:$0xf]
  %v472 = vld [vmem:[%s2 + $0x1bc] sm:$0xf]
  %v473 = vld [vmem:[%s2 + $0x1c0] sm:$0xf]
  %v474 = vld [vmem:[%s2 + $0x1c4] sm:$0xf]
  %v475 = vld [vmem:[%s2 + $0x1c8] sm:$0xf]
  %v476 = vld [vmem:[%s2 + $0x1cc] sm:$0xf]
  %v477 = vld [vmem:[%s2 + $0x1d0] sm:$0xf]
  %v478 = vld [vmem:[%s2 + $0x1d4] sm:$0xf]
  %v479 = vld [vmem:[%s2 + $0x1d8] sm:$0xf]
  %v480 = vld [vmem:[%s2 + $0x1dc] sm:$0xf]
  %v481 = vld [vmem:[%s2 + $0x1e0] sm:$0xf]
  %v482 = vld [vmem:[%s2 + $0x1e4] sm:$0xf]
  %v483 = vld [vmem:[%s2 + $0x1e8] sm:$0xf]
  %v484 = vld [vmem:[%s2 + $0x1ec] sm:$0xf]
  %v485 = vld [vmem:[%s2 + $0x1f0] sm:$0xf]
  %v486 = vld [vmem:[%s2 + $0x1f4] sm:$0xf]
  %v487 = vld [vmem:[%s2 + $0x1f8] sm:$0xf]
  %v488 = vld [vmem:[%s2 + $0x1fc] sm:$0xf]
  %v489 = vld [vmem:[%s2 + $0x200] sm:$0xf]
  %v490 = vld [vmem:[%s2 + $0x204] sm:$0xf]
  %v491 = vld [vmem:[%s2 + $0x208] sm:$0xf]
  %v492 = vld [vmem:[%s2 + $0x20c] sm:$0xf]
  %v493 = vld [vmem:[%s2 + $0x210] sm:$0xf]
  %v494 = vld [vmem:[%s2 + $0x214] sm:$0xf]
  %v495 = vld [vmem:[%s2 + $0x218] sm:$0xf]
  %v496 = vld [vmem:[%s2 + $0x21c] sm:$0xf]
  %v497 = vld [vmem:[%s2 + $0x220] sm:$0xf]
  %v498 = vld [vmem:[%s2 + $0x224] sm:$0xf]
  %v499 = vld [vmem:[%s2 + $0x228] sm:$0xf]
  %v500 = vld [vmem:[%s2 + $0x22c] sm:$0xf]
  %v501 = vld [vmem:[%s2 + $0x230] sm:$0xf]
  %v502 = vld [vmem:[%s2 + $0x234] sm:$0xf]
  %v503 = vld [vmem:[%s2 + $0x238] sm:$0xf]
  %v504 = vld [vmem:[%s2 + $0x23c] sm:$0xf]
  %v505 = vld [vmem:[%s2 + $0x240] sm:$0xf]
  %v506 = vld [vmem:[%s2 + $0x244] sm:$0xf]
  %v507 = vld [vmem:[%s2 + $0x248] sm:$0xf]
  %v508 = vld [vmem:[%s2 + $0x24c] sm:$0xf]
  %v509 = vld [vmem:[%s2 + $0x250] sm:$0xf]
  %v510 = vld [vmem:[%s2 + $0x254] sm:$0xf]
  %v511 = vld [vmem:[%s2 + $0x258] sm:$0xf]
  %v512 = vld [vmem:[%s2 + $0x25c] sm:$0xf]
  %v513 = vld [vmem:[%s2 + $0x260] sm:$0xf]
  %v514 = vld [vmem:[%s2 + $0x264] sm:$0xf]
  %v515 = vld [vmem:[%s2 + $0x268] sm:$0xf]
  %v516 = vld [vmem:[%s2 + $0x26c] sm:$0xf]
  %v517 = vld [vmem:[%s2 + $0x270] sm:$0xf]
  %v518 = vld [vmem:[%s2 + $0x274] sm:$0xf]
  %v519 = vld [vmem:[%s2 + $0x278] sm:$0xf]
  %v520 = vld [vmem:[%s2 + $0x27c] sm:$0xf]
  %v521 = vld [vmem:[%s2 + $0x280] sm:$0xf]
  %v522 = vld [vmem:[%s2 + $0x284] sm:$0xf]
  %v523 = vld [vmem:[%s2 + $0x288] sm:$0xf]
  %v524 = vld [vmem:[%s2 + $0x28c] sm:$0xf]
  %v525 = vld [vmem:[%s2 + $0x290] sm:$0xf]
  %v526 = vld [vmem:[%s2 + $0x294] sm:$0xf]
  %v527 = vld [vmem:[%s2 + $0x298] sm:$0xf]
  %v528 = vld [vmem:[%s2 + $0x29c] sm:$0xf]
  %v529 = vld [vmem:[%s2 + $0x2a0] sm:$0xf]
  %v530 = vld [vmem:[%s2 + $0x2a4] sm:$0xf]
  %v531 = vld [vmem:[%s2 + $0x2a8] sm:$0xf]
  %v532 = vld [vmem:[%s2 + $0x2ac] sm:$0xf]
  %v533 = vld [vmem:[%s2 + $0x2b0] sm:$0xf]
  %v534 = vld [vmem:[%s2 + $0x2b4] sm:$0xf]
  %v535 = vld [vmem:[%s2 + $0x2b8] sm:$0xf]
  %v536 = vld [vmem:[%s2 + $0x2bc] sm:$0xf]
  %v537 = vld [vmem:[%s2 + $0x2c0] sm:$0xf]
  %v538 = vld [vmem:[%s2 + $0x2c4] sm:$0xf]
  %v539 = vld [vmem:[%s2 + $0x2c8] sm:$0xf]
  %v540 = vld [vmem:[%s2 + $0x2cc] sm:$0xf]
  %v541 = vld [vmem:[%s2 + $0x2d0] sm:$0xf]
  %v542 = vld [vmem:[%s2 + $0x2d4] sm:$0xf]
  %v543 = vld [vmem:[%s2 + $0x2d8] sm:$0xf]
  %v544 = vld [vmem:[%s2 + $0x2dc] sm:$0xf]
  %v545 = vld [vmem:[%s2 + $0x2e0] sm:$0xf]
  %v546 = vld [vmem:[%s2 + $0x2e4] sm:$0xf]
  %v547 = vld [vmem:[%s2 + $0x2e8] sm:$0xf]
  %v548 = vld [vmem:[%s2 + $0x2ec] sm:$0xf]
  %v549 = vld [vmem:[%s2 + $0x2f0] sm:$0xf]
  %v550 = vld [vmem:[%s2 + $0x2f4] sm:$0xf]
  %v551 = vld [vmem:[%s2 + $0x2f8] sm:$0xf]
  %v552 = vld [vmem:[%s2 + $0x2fc] sm:$0xf]
  %v553 = vld [vmem:[%s2 + $0x300] sm:$0xf]
  %v554 = vld [vmem:[%s2 + $0x304] sm:$0xf]
  %v555 = vld [vmem:[%s2 + $0x308] sm:$0xf]
  %v556 = vld [vmem:[%s2 + $0x30c] sm:$0xf]
  %v557 = vld [vmem:[%s2 + $0x310] sm:$0xf]
  %v558 = vld [vmem:[%s2 + $0x314] sm:$0xf]
  %v559 = vld [vmem:[%s2 + $0x318] sm:$0xf]
  %v560 = vld [vmem:[%s2 + $0x31c] sm:$0xf]
  %v561 = vld [vmem:[%s2 + $0x320] sm:$0xf]
  %v562 = vld [vmem:[%s2 + $0x324] sm:$0xf]
  %v563 = vld [vmem:[%s2 + $0x328] sm:$0xf]
  %v564 = vld [vmem:[%s2 + $0x32c] sm:$0xf]
  %v565 = vld [vmem:[%s2 + $0x330] sm:$0xf]
  %v566 = vld [vmem:[%s2 + $0x334] sm:$0xf]
  %v567 = vld [vmem:[%s2 + $0x338] sm:$0xf]
  %v568 = vld [vmem:[%s2 + $0x33c] sm:$0xf]
  %v569 = vld [vmem:[%s3] sm:$0x1]
  %v570 = vlaneseq
  %v571 = vshrl.u32 %v570, 7
  %v572 = vsub.s32 0, %v571
  %v573 = vrot.slane %v569, %v572
  %v782 = vunpack.c.l.b16 %v361
  %v783 = vunpack.c.l.b16 %v362
  %v784 = vunpack.c.l.b16 %v363
  %v785 = vunpack.c.l.b16 %v364
  %v786 = vunpack.c.l.b16 %v365
  %v787 = vunpack.c.l.b16 %v366
  %v788 = vunpack.c.l.b16 %v367
  %v789 = vunpack.c.l.b16 %v368
  %v790 = vunpack.c.l.b16 %v369
  %v791 = vunpack.c.l.b16 %v370
  %v792 = vunpack.c.l.b16 %v371
  %v793 = vunpack.c.l.b16 %v372
  %v794 = vunpack.c.l.b16 %v373
  %v795 = vunpack.c.l.b16 %v374
  %v796 = vunpack.c.l.b16 %v375
  %v797 = vunpack.c.l.b16 %v376
  %v798 = vunpack.c.l.b16 %v377
  %v799 = vunpack.c.l.b16 %v378
  %v800 = vunpack.c.l.b16 %v379
  %v801 = vunpack.c.l.b16 %v380
  %v802 = vunpack.c.l.b16 %v381
  %v803 = vunpack.c.l.b16 %v382
  %v804 = vunpack.c.l.b16 %v383
  %v805 = vunpack.c.l.b16 %v384
  %v806 = vunpack.c.l.b16 %v385
  %v807 = vunpack.c.l.b16 %v386
  %v808 = vunpack.c.l.b16 %v387
  %v809 = vunpack.c.l.b16 %v388
  %v810 = vunpack.c.l.b16 %v389
  %v811 = vunpack.c.l.b16 %v390
  %v812 = vunpack.c.l.b16 %v391
  %v813 = vunpack.c.l.b16 %v392
  %v814 = vunpack.c.l.b16 %v393
  %v815 = vunpack.c.l.b16 %v394
  %v816 = vunpack.c.l.b16 %v395
  %v817 = vunpack.c.l.b16 %v396
  %v818 = vunpack.c.l.b16 %v397
  %v819 = vunpack.c.l.b16 %v398
  %v820 = vunpack.c.l.b16 %v399
  %v821 = vunpack.c.l.b16 %v400
  %v822 = vunpack.c.l.b16 %v401
  %v823 = vunpack.c.l.b16 %v402
  %v824 = vunpack.c.l.b16 %v403
  %v825 = vunpack.c.l.b16 %v404
  %v826 = vunpack.c.l.b16 %v405
  %v827 = vunpack.c.l.b16 %v406
  %v828 = vunpack.c.l.b16 %v407
  %v829 = vunpack.c.l.b16 %v408
  %v830 = vunpack.c.l.b16 %v409
  %v831 = vunpack.c.l.b16 %v410
  %v832 = vunpack.c.l.b16 %v411
  %v833 = vunpack.c.l.b16 %v412
  %v834 = vunpack.c.l.b16 %v413
  %v835 = vunpack.c.l.b16 %v414
  %v836 = vunpack.c.l.b16 %v415
  %v837 = vunpack.c.l.b16 %v416
  %v838 = vunpack.c.l.b16 %v417
  %v839 = vunpack.c.l.b16 %v418
  %v840 = vunpack.c.l.b16 %v419
  %v841 = vunpack.c.l.b16 %v420
  %v842 = vunpack.c.l.b16 %v421
  %v843 = vunpack.c.l.b16 %v422
  %v844 = vunpack.c.l.b16 %v423
  %v845 = vunpack.c.l.b16 %v424
  %v846 = vunpack.c.l.b16 %v425
  %v847 = vunpack.c.l.b16 %v426
  %v848 = vunpack.c.l.b16 %v427
  %v849 = vunpack.c.l.b16 %v428
  %v850 = vunpack.c.l.b16 %v429
  %v851 = vunpack.c.l.b16 %v430
  %v852 = vunpack.c.l.b16 %v431
  %v853 = vunpack.c.l.b16 %v432
  %v854 = vunpack.c.l.b16 %v433
  %v855 = vunpack.c.l.b16 %v434
  %v856 = vunpack.c.l.b16 %v435
  %v857 = vunpack.c.l.b16 %v436
  %v858 = vunpack.c.l.b16 %v437
  %v859 = vunpack.c.l.b16 %v438
  %v860 = vunpack.c.l.b16 %v439
  %v861 = vunpack.c.l.b16 %v440
  %v862 = vunpack.c.l.b16 %v441
  %v863 = vunpack.c.l.b16 %v442
  %v864 = vunpack.c.l.b16 %v443
  %v865 = vunpack.c.l.b16 %v444
  %v866 = vunpack.c.l.b16 %v445
  %v867 = vunpack.c.l.b16 %v446
  %v868 = vunpack.c.l.b16 %v447
  %v869 = vunpack.c.l.b16 %v448
  %v870 = vunpack.c.l.b16 %v449
  %v871 = vunpack.c.l.b16 %v450
  %v872 = vunpack.c.l.b16 %v451
  %v873 = vunpack.c.l.b16 %v452
  %v874 = vunpack.c.l.b16 %v453
  %v875 = vunpack.c.l.b16 %v454
  %v876 = vunpack.c.l.b16 %v455
  %v877 = vunpack.c.l.b16 %v456
  %v878 = vunpack.c.l.b16 %v457
  %v879 = vunpack.c.l.b16 %v458
  %v880 = vunpack.c.l.b16 %v459
  %v881 = vunpack.c.l.b16 %v460
  %v882 = vunpack.c.l.b16 %v461
  %v883 = vunpack.c.l.b16 %v462
  %v884 = vunpack.c.l.b16 %v463
  %v885 = vunpack.c.l.b16 %v464
  %v886 = vunpack.c.l.b16 %v465
  %v887 = vunpack.c.l.b16 %v466
  %v888 = vunpack.c.l.b16 %v467
  %v889 = vunpack.c.l.b16 %v468
  %v890 = vunpack.c.l.b16 %v469
  %v891 = vunpack.c.l.b16 %v470
  %v892 = vunpack.c.l.b16 %v471
  %v893 = vunpack.c.l.b16 %v472
  %v894 = vunpack.c.l.b16 %v473
  %v895 = vunpack.c.l.b16 %v474
  %v896 = vunpack.c.l.b16 %v475
  %v897 = vunpack.c.l.b16 %v476
  %v898 = vunpack.c.l.b16 %v477
  %v899 = vunpack.c.l.b16 %v478
  %v900 = vunpack.c.l.b16 %v479
  %v901 = vunpack.c.l.b16 %v480
  %v902 = vunpack.c.l.b16 %v481
  %v903 = vunpack.c.l.b16 %v482
  %v904 = vunpack.c.l.b16 %v483
  %v905 = vunpack.c.l.b16 %v484
  %v906 = vunpack.c.l.b16 %v485
  %v907 = vunpack.c.l.b16 %v486
  %v908 = vunpack.c.l.b16 %v487
  %v909 = vunpack.c.l.b16 %v488
  %v910 = vunpack.c.l.b16 %v489
  %v911 = vunpack.c.l.b16 %v490
  %v912 = vunpack.c.l.b16 %v491
  %v913 = vunpack.c.l.b16 %v492
  %v914 = vunpack.c.l.b16 %v493
  %v915 = vunpack.c.l.b16 %v494
  %v916 = vunpack.c.l.b16 %v495
  %v917 = vunpack.c.l.b16 %v496
  %v918 = vunpack.c.l.b16 %v497
  %v919 = vunpack.c.l.b16 %v498
  %v920 = vunpack.c.l.b16 %v499
  %v921 = vunpack.c.l.b16 %v500
  %v922 = vunpack.c.l.b16 %v501
  %v923 = vunpack.c.l.b16 %v502
  %v924 = vunpack.c.l.b16 %v503
  %v925 = vunpack.c.l.b16 %v504
  %v926 = vunpack.c.l.b16 %v505
  %v927 = vunpack.c.l.b16 %v506
  %v928 = vunpack.c.l.b16 %v507
  %v929 = vunpack.c.l.b16 %v508
  %v930 = vunpack.c.l.b16 %v509
  %v931 = vunpack.c.l.b16 %v510
  %v932 = vunpack.c.l.b16 %v511
  %v933 = vunpack.c.l.b16 %v512
  %v934 = vunpack.c.l.b16 %v513
  %v935 = vunpack.c.l.b16 %v514
  %v936 = vunpack.c.l.b16 %v515
  %v937 = vunpack.c.l.b16 %v516
  %v938 = vunpack.c.l.b16 %v517
  %v939 = vunpack.c.l.b16 %v518
  %v940 = vunpack.c.l.b16 %v519
  %v941 = vunpack.c.l.b16 %v520
  %v942 = vunpack.c.l.b16 %v521
  %v943 = vunpack.c.l.b16 %v522
  %v944 = vunpack.c.l.b16 %v523
  %v945 = vunpack.c.l.b16 %v524
  %v946 = vunpack.c.l.b16 %v525
  %v947 = vunpack.c.l.b16 %v526
  %v948 = vunpack.c.l.b16 %v527
  %v949 = vunpack.c.l.b16 %v528
  %v950 = vunpack.c.l.b16 %v529
  %v951 = vunpack.c.l.b16 %v530
  %v952 = vunpack.c.l.b16 %v531
  %v953 = vunpack.c.l.b16 %v532
  %v954 = vunpack.c.l.b16 %v533
  %v955 = vunpack.c.l.b16 %v534
  %v956 = vunpack.c.l.b16 %v535
  %v957 = vunpack.c.l.b16 %v536
  %v958 = vunpack.c.l.b16 %v537
  %v959 = vunpack.c.l.b16 %v538
  %v960 = vunpack.c.l.b16 %v539
  %v961 = vunpack.c.l.b16 %v540
  %v962 = vunpack.c.l.b16 %v541
  %v963 = vunpack.c.l.b16 %v542
  %v964 = vunpack.c.l.b16 %v543
  %v965 = vunpack.c.l.b16 %v544
  %v966 = vunpack.c.l.b16 %v545
  %v967 = vunpack.c.l.b16 %v546
  %v968 = vunpack.c.l.b16 %v547
  %v969 = vunpack.c.l.b16 %v548
  %v970 = vunpack.c.l.b16 %v549
  %v971 = vunpack.c.l.b16 %v550
  %v972 = vunpack.c.l.b16 %v551
  %v973 = vunpack.c.l.b16 %v552
  %v974 = vunpack.c.l.b16 %v553
  %v975 = vunpack.c.l.b16 %v554
  %v976 = vunpack.c.l.b16 %v555
  %v977 = vunpack.c.l.b16 %v556
  %v978 = vunpack.c.l.b16 %v557
  %v979 = vunpack.c.l.b16 %v558
  %v980 = vunpack.c.l.b16 %v559
  %v981 = vunpack.c.l.b16 %v560
  %v982 = vunpack.c.l.b16 %v561
  %v983 = vunpack.c.l.b16 %v562
  %v984 = vunpack.c.l.b16 %v563
  %v985 = vunpack.c.l.b16 %v564
  %v986 = vunpack.c.l.b16 %v565
  %v987 = vunpack.c.l.b16 %v566
  %v988 = vunpack.c.l.b16 %v567
  %v989 = vunpack.c.l.b16 %v568
  %v990 = vpack.c.b16 %v783, %v782
  %v991 = vpack.c.b16 %v785, %v784
  %v992 = vpack.c.b16 %v787, %v786
  %v993 = vpack.c.b16 %v789, %v788
  %v994 = vpack.c.b16 %v791, %v790
  %v995 = vpack.c.b16 %v793, %v792
  %v996 = vpack.c.b16 %v795, %v794
  %v997 = vpack.c.b16 %v797, %v796
  %v998 = vpack.c.b16 %v799, %v798
  %v999 = vpack.c.b16 %v801, %v800
  %v1000 = vpack.c.b16 %v803, %v802
  %v1001 = vpack.c.b16 %v805, %v804
  %v1002 = vpack.c.b16 %v807, %v806
  %v1003 = vpack.c.b16 %v809, %v808
  %v1004 = vpack.c.b16 %v811, %v810
  %v1005 = vpack.c.b16 %v813, %v812
  %v1006 = vpack.c.b16 %v815, %v814
  %v1007 = vpack.c.b16 %v817, %v816
  %v1008 = vpack.c.b16 %v819, %v818
  %v1009 = vpack.c.b16 %v821, %v820
  %v1010 = vpack.c.b16 %v823, %v822
  %v1011 = vpack.c.b16 %v825, %v824
  %v1012 = vpack.c.b16 %v827, %v826
  %v1013 = vpack.c.b16 %v829, %v828
  %v1014 = vpack.c.b16 %v831, %v830
  %v1015 = vpack.c.b16 %v833, %v832
  %v1016 = vpack.c.b16 %v835, %v834
  %v1017 = vpack.c.b16 %v837, %v836
  %v1018 = vpack.c.b16 %v839, %v838
  %v1019 = vpack.c.b16 %v841, %v840
  %v1020 = vpack.c.b16 %v843, %v842
  %v1021 = vpack.c.b16 %v845, %v844
  %v1022 = vpack.c.b16 %v847, %v846
  %v1023 = vpack.c.b16 %v849, %v848
  %v1024 = vpack.c.b16 %v851, %v850
  %v1025 = vpack.c.b16 %v853, %v852
  %v1026 = vpack.c.b16 %v855, %v854
  %v1027 = vpack.c.b16 %v857, %v856
  %v1028 = vpack.c.b16 %v859, %v858
  %v1029 = vpack.c.b16 %v861, %v860
  %v1030 = vpack.c.b16 %v863, %v862
  %v1031 = vpack.c.b16 %v865, %v864
  %v1032 = vpack.c.b16 %v867, %v866
  %v1033 = vpack.c.b16 %v869, %v868
  %v1034 = vpack.c.b16 %v871, %v870
  %v1035 = vpack.c.b16 %v873, %v872
  %v1036 = vpack.c.b16 %v875, %v874
  %v1037 = vpack.c.b16 %v877, %v876
  %v1038 = vpack.c.b16 %v879, %v878
  %v1039 = vpack.c.b16 %v881, %v880
  %v1040 = vpack.c.b16 %v883, %v882
  %v1041 = vpack.c.b16 %v885, %v884
  %v1042 = vpack.c.b16 %v887, %v886
  %v1043 = vpack.c.b16 %v889, %v888
  %v1044 = vpack.c.b16 %v891, %v890
  %v1045 = vpack.c.b16 %v893, %v892
  %v1046 = vpack.c.b16 %v895, %v894
  %v1047 = vpack.c.b16 %v897, %v896
  %v1048 = vpack.c.b16 %v899, %v898
  %v1049 = vpack.c.b16 %v901, %v900
  %v1050 = vpack.c.b16 %v903, %v902
  %v1051 = vpack.c.b16 %v905, %v904
  %v1052 = vpack.c.b16 %v907, %v906
  %v1053 = vpack.c.b16 %v909, %v908
  %v1054 = vpack.c.b16 %v911, %v910
  %v1055 = vpack.c.b16 %v913, %v912
  %v1056 = vpack.c.b16 %v915, %v914
  %v1057 = vpack.c.b16 %v917, %v916
  %v1058 = vpack.c.b16 %v919, %v918
  %v1059 = vpack.c.b16 %v921, %v920
  %v1060 = vpack.c.b16 %v923, %v922
  %v1061 = vpack.c.b16 %v925, %v924
  %v1062 = vpack.c.b16 %v927, %v926
  %v1063 = vpack.c.b16 %v929, %v928
  %v1064 = vpack.c.b16 %v931, %v930
  %v1065 = vpack.c.b16 %v933, %v932
  %v1066 = vpack.c.b16 %v935, %v934
  %v1067 = vpack.c.b16 %v937, %v936
  %v1068 = vpack.c.b16 %v939, %v938
  %v1069 = vpack.c.b16 %v941, %v940
  %v1070 = vpack.c.b16 %v943, %v942
  %v1071 = vpack.c.b16 %v945, %v944
  %v1072 = vpack.c.b16 %v947, %v946
  %v1073 = vpack.c.b16 %v949, %v948
  %v1074 = vpack.c.b16 %v951, %v950
  %v1075 = vpack.c.b16 %v953, %v952
  %v1076 = vpack.c.b16 %v955, %v954
  %v1077 = vpack.c.b16 %v957, %v956
  %v1078 = vpack.c.b16 %v959, %v958
  %v1079 = vpack.c.b16 %v961, %v960
  %v1080 = vpack.c.b16 %v963, %v962
  %v1081 = vpack.c.b16 %v965, %v964
  %v1082 = vpack.c.b16 %v967, %v966
  %v1083 = vpack.c.b16 %v969, %v968
  %v1084 = vpack.c.b16 %v971, %v970
  %v1085 = vpack.c.b16 %v973, %v972
  %v1086 = vpack.c.b16 %v975, %v974
  %v1087 = vpack.c.b16 %v977, %v976
  %v1088 = vpack.c.b16 %v979, %v978
  %v1089 = vpack.c.b16 %v981, %v980
  %v1090 = vpack.c.b16 %v983, %v982
  %v1091 = vpack.c.b16 %v985, %v984
  %v1092 = vpack.c.b16 %v987, %v986
  %v1093 = vpack.c.b16 %v989, %v988
  %1198 = vmatprep.subr.bf16.mxu0 0
  %1199 = vmatpush1.bf16.msra.mxu0 %v997
  %1200 = vmatprep.subr.bf16.mxu0 0
  %1201 = vmatpush1.bf16.msra.mxu0 %v996
  %1202 = vmatprep.subr.bf16.mxu0 0
  %1203 = vmatpush1.bf16.msra.mxu0 %v995
  %1204 = vmatprep.subr.bf16.mxu0 0
  %1205 = vmatpush1.bf16.msra.mxu0 %v994
  %1206 = vmatprep.subr.bf16.mxu0 0
  %1207 = vmatpush1.bf16.msra.mxu0 %v993
  %1208 = vmatprep.subr.bf16.mxu0 0
  %1209 = vmatpush1.bf16.msra.mxu0 %v992
  %1210 = vmatprep.subr.bf16.mxu0 0
  %1211 = vmatpush1.bf16.msra.mxu0 %v991
  %1212 = vmatprep.subr.bf16.mxu0 0
  %1213 = vmatpush1.bf16.msra.mxu0 %v990
  %1214 = vmatprep.subr.bf16.mxu0 0
  %1215 = vmatpush2.bf16.msra.mxu0 %v1005
  %1216 = vmatprep.subr.bf16.mxu0 0
  %1217 = vmatpush2.bf16.msra.mxu0 %v1004
  %1218 = vmatprep.subr.bf16.mxu0 0
  %1219 = vmatpush2.bf16.msra.mxu0 %v1003
  %1220 = vmatprep.subr.bf16.mxu0 0
  %1221 = vmatpush2.bf16.msra.mxu0 %v1002
  %1222 = vmatprep.subr.bf16.mxu0 0
  %1223 = vmatpush2.bf16.msra.mxu0 %v1001
  %1224 = vmatprep.subr.bf16.mxu0 0
  %1225 = vmatpush2.bf16.msra.mxu0 %v1000
  %1226 = vmatprep.subr.bf16.mxu0 0
  %1227 = vmatpush2.bf16.msra.mxu0 %v999
  %1228 = vmatprep.subr.bf16.mxu0 0
  %1229 = vmatpush2.bf16.msra.mxu0 %v998
  %1230 = vmatprep.mubr.bf16.mxu0 %v349
  %1231 = vmatmul.mubr.bf16.gmra.mxu0 %v348
  %v1232 = vpop.f32.mrf.mxu0
  %v1233 = vadd.f32 %v573, %v1232
  %v1234 = vpop.f32.mrf.mxu0
  %v1235 = vpop.f32.mrf.mxu0
  %v1236 = vpop.f32.mrf.mxu0
  %1237 = vdwg.mxu0
  %1238 = vmatprep.subr.bf16.mxu0 0
  %1239 = vmatpush1.bf16.msra.mxu0 %v1013
  %1240 = vmatprep.subr.bf16.mxu0 0
  %1241 = vmatpush1.bf16.msra.mxu0 %v1012
  %1242 = vmatprep.subr.bf16.mxu0 0
  %1243 = vmatpush1.bf16.msra.mxu0 %v1011
  %1244 = vmatprep.subr.bf16.mxu0 0
  %1245 = vmatpush1.bf16.msra.mxu0 %v1010
  %1246 = vmatprep.subr.bf16.mxu0 0
  %1247 = vmatpush1.bf16.msra.mxu0 %v1009
  %1248 = vmatprep.subr.bf16.mxu0 0
  %1249 = vmatpush1.bf16.msra.mxu0 %v1008
  %1250 = vmatprep.subr.bf16.mxu0 0
  %1251 = vmatpush1.bf16.msra.mxu0 %v1007
  %1252 = vmatprep.subr.bf16.mxu0 0
  %1253 = vmatpush1.bf16.msra.mxu0 %v1006
  %1254 = vmatprep.subr.bf16.mxu0 0
  %1255 = vmatpush2.bf16.msra.mxu0 %v1021
  %1256 = vmatprep.subr.bf16.mxu0 0
  %1257 = vmatpush2.bf16.msra.mxu0 %v1020
  %1258 = vmatprep.subr.bf16.mxu0 0
  %1259 = vmatpush2.bf16.msra.mxu0 %v1019
  %1260 = vmatprep.subr.bf16.mxu0 0
  %1261 = vmatpush2.bf16.msra.mxu0 %v1018
  %1262 = vmatprep.subr.bf16.mxu0 0
  %1263 = vmatpush2.bf16.msra.mxu0 %v1017
  %1264 = vmatprep.subr.bf16.mxu0 0
  %1265 = vmatpush2.bf16.msra.mxu0 %v1016
  %1266 = vmatprep.subr.bf16.mxu0 0
  %1267 = vmatpush2.bf16.msra.mxu0 %v1015
  %1268 = vmatprep.subr.bf16.mxu0 0
  %1269 = vmatpush2.bf16.msra.mxu0 %v1014
  %1270 = vmatprep.mubr.bf16.mxu0 %v351
  %1271 = vmatmul.mubr.bf16.gmra.mxu0 %v350
  %v1272 = vpop.f32.mrf.mxu0
  %v1273 = vadd.f32 %v1233, %v1272
  %v1274 = vpop.f32.mrf.mxu0
  %v1275 = vpop.f32.mrf.mxu0
  %v1276 = vpop.f32.mrf.mxu0
  %1277 = vdwg.mxu0
  %1278 = vmatprep.subr.bf16.mxu0 0
  %1279 = vmatpush1.bf16.msra.mxu0 %v1029
  %1280 = vmatprep.subr.bf16.mxu0 0
  %1281 = vmatpush1.bf16.msra.mxu0 %v1028
  %1282 = vmatprep.subr.bf16.mxu0 0
  %1283 = vmatpush1.bf16.msra.mxu0 %v1027
  %1284 = vmatprep.subr.bf16.mxu0 0
  %1285 = vmatpush1.bf16.msra.mxu0 %v1026
  %1286 = vmatprep.subr.bf16.mxu0 0
  %1287 = vmatpush1.bf16.msra.mxu0 %v1025
  %1288 = vmatprep.subr.bf16.mxu0 0
  %1289 = vmatpush1.bf16.msra.mxu0 %v1024
  %1290 = vmatprep.subr.bf16.mxu0 0
  %1291 = vmatpush1.bf16.msra.mxu0 %v1023
  %1292 = vmatprep.subr.bf16.mxu0 0
  %1293 = vmatpush1.bf16.msra.mxu0 %v1022
  %1294 = vmatprep.subr.bf16.mxu0 0
  %1295 = vmatpush2.bf16.msra.mxu0 %v1037
  %1296 = vmatprep.subr.bf16.mxu0 0
  %1297 = vmatpush2.bf16.msra.mxu0 %v1036
  %1298 = vmatprep.subr.bf16.mxu0 0
  %1299 = vmatpush2.bf16.msra.mxu0 %v1035
  %1300 = vmatprep.subr.bf16.mxu0 0
  %1301 = vmatpush2.bf16.msra.mxu0 %v1034
  %1302 = vmatprep.subr.bf16.mxu0 0
  %1303 = vmatpush2.bf16.msra.mxu0 %v1033
  %1304 = vmatprep.subr.bf16.mxu0 0
  %1305 = vmatpush2.bf16.msra.mxu0 %v1032
  %1306 = vmatprep.subr.bf16.mxu0 0
  %1307 = vmatpush2.bf16.msra.mxu0 %v1031
  %1308 = vmatprep.subr.bf16.mxu0 0
  %1309 = vmatpush2.bf16.msra.mxu0 %v1030
  %1310 = vmatprep.mubr.bf16.mxu0 %v353
  %1311 = vmatmul.mubr.bf16.gmra.mxu0 %v352
  %v1312 = vpop.f32.mrf.mxu0
  %v1313 = vadd.f32 %v1273, %v1312
  %v1314 = vpop.f32.mrf.mxu0
  %v1315 = vpop.f32.mrf.mxu0
  %v1316 = vpop.f32.mrf.mxu0
  %1317 = vdwg.mxu0
  %1318 = vmatprep.subr.bf16.mxu0 0
  %1319 = vmatpush1.bf16.msra.mxu0 %v1045
  %1320 = vmatprep.subr.bf16.mxu0 0
  %1321 = vmatpush1.bf16.msra.mxu0 %v1044
  %1322 = vmatprep.subr.bf16.mxu0 0
  %1323 = vmatpush1.bf16.msra.mxu0 %v1043
  %1324 = vmatprep.subr.bf16.mxu0 0
  %1325 = vmatpush1.bf16.msra.mxu0 %v1042
  %1326 = vmatprep.subr.bf16.mxu0 0
  %1327 = vmatpush1.bf16.msra.mxu0 %v1041
  %1328 = vmatprep.subr.bf16.mxu0 0
  %1329 = vmatpush1.bf16.msra.mxu0 %v1040
  %1330 = vmatprep.subr.bf16.mxu0 0
  %1331 = vmatpush1.bf16.msra.mxu0 %v1039
  %1332 = vmatprep.subr.bf16.mxu0 0
  %1333 = vmatpush1.bf16.msra.mxu0 %v1038
  %1334 = vmatprep.subr.bf16.mxu0 0
  %1335 = vmatpush2.bf16.msra.mxu0 %v1053
  %1336 = vmatprep.subr.bf16.mxu0 0
  %1337 = vmatpush2.bf16.msra.mxu0 %v1052
  %1338 = vmatprep.subr.bf16.mxu0 0
  %1339 = vmatpush2.bf16.msra.mxu0 %v1051
  %1340 = vmatprep.subr.bf16.mxu0 0
  %1341 = vmatpush2.bf16.msra.mxu0 %v1050
  %1342 = vmatprep.subr.bf16.mxu0 0
  %1343 = vmatpush2.bf16.msra.mxu0 %v1049
  %1344 = vmatprep.subr.bf16.mxu0 0
  %1345 = vmatpush2.bf16.msra.mxu0 %v1048
  %1346 = vmatprep.subr.bf16.mxu0 0
  %1347 = vmatpush2.bf16.msra.mxu0 %v1047
  %1348 = vmatprep.subr.bf16.mxu0 0
  %1349 = vmatpush2.bf16.msra.mxu0 %v1046
  %1350 = vmatprep.mubr.bf16.mxu0 %v355
  %1351 = vmatmul.mubr.bf16.gmra.mxu0 %v354
  %v1352 = vpop.f32.mrf.mxu0
  %v1353 = vadd.f32 %v1313, %v1352
  %v1354 = vpop.f32.mrf.mxu0
  %v1355 = vpop.f32.mrf.mxu0
  %v1356 = vpop.f32.mrf.mxu0
  %1357 = vdwg.mxu0
  %1358 = vmatprep.subr.bf16.mxu0 0
  %1359 = vmatpush1.bf16.msra.mxu0 %v1061
  %1360 = vmatprep.subr.bf16.mxu0 0
  %1361 = vmatpush1.bf16.msra.mxu0 %v1060
  %1362 = vmatprep.subr.bf16.mxu0 0
  %1363 = vmatpush1.bf16.msra.mxu0 %v1059
  %1364 = vmatprep.subr.bf16.mxu0 0
  %1365 = vmatpush1.bf16.msra.mxu0 %v1058
  %1366 = vmatprep.subr.bf16.mxu0 0
  %1367 = vmatpush1.bf16.msra.mxu0 %v1057
  %1368 = vmatprep.subr.bf16.mxu0 0
  %1369 = vmatpush1.bf16.msra.mxu0 %v1056
  %1370 = vmatprep.subr.bf16.mxu0 0
  %1371 = vmatpush1.bf16.msra.mxu0 %v1055
  %1372 = vmatprep.subr.bf16.mxu0 0
  %1373 = vmatpush1.bf16.msra.mxu0 %v1054
  %1374 = vmatprep.subr.bf16.mxu0 0
  %1375 = vmatpush2.bf16.msra.mxu0 %v1069
  %1376 = vmatprep.subr.bf16.mxu0 0
  %1377 = vmatpush2.bf16.msra.mxu0 %v1068
  %1378 = vmatprep.subr.bf16.mxu0 0
  %1379 = vmatpush2.bf16.msra.mxu0 %v1067
  %1380 = vmatprep.subr.bf16.mxu0 0
  %1381 = vmatpush2.bf16.msra.mxu0 %v1066
  %1382 = vmatprep.subr.bf16.mxu0 0
  %1383 = vmatpush2.bf16.msra.mxu0 %v1065
  %1384 = vmatprep.subr.bf16.mxu0 0
  %1385 = vmatpush2.bf16.msra.mxu0 %v1064
  %1386 = vmatprep.subr.bf16.mxu0 0
  %1387 = vmatpush2.bf16.msra.mxu0 %v1063
  %1388 = vmatprep.subr.bf16.mxu0 0
  %1389 = vmatpush2.bf16.msra.mxu0 %v1062
  %1390 = vmatprep.mubr.bf16.mxu0 %v357
  %1391 = vmatmul.mubr.bf16.gmra.mxu0 %v356
  %v1392 = vpop.f32.mrf.mxu0
  %v1393 = vadd.f32 %v1353, %v1392
  %v1394 = vpop.f32.mrf.mxu0
  %v1395 = vpop.f32.mrf.mxu0
  %v1396 = vpop.f32.mrf.mxu0
  %1397 = vdwg.mxu0
  %1398 = vmatprep.subr.bf16.mxu0 0
  %1399 = vmatpush1.bf16.msra.mxu0 %v1077
  %1400 = vmatprep.subr.bf16.mxu0 0
  %1401 = vmatpush1.bf16.msra.mxu0 %v1076
  %1402 = vmatprep.subr.bf16.mxu0 0
  %1403 = vmatpush1.bf16.msra.mxu0 %v1075
  %1404 = vmatprep.subr.bf16.mxu0 0
  %1405 = vmatpush1.bf16.msra.mxu0 %v1074
  %1406 = vmatprep.subr.bf16.mxu0 0
  %1407 = vmatpush1.bf16.msra.mxu0 %v1073
  %1408 = vmatprep.subr.bf16.mxu0 0
  %1409 = vmatpush1.bf16.msra.mxu0 %v1072
  %1410 = vmatprep.subr.bf16.mxu0 0
  %1411 = vmatpush1.bf16.msra.mxu0 %v1071
  %1412 = vmatprep.subr.bf16.mxu0 0
  %1413 = vmatpush1.bf16.msra.mxu0 %v1070
  %1414 = vmatprep.subr.bf16.mxu0 0
  %1415 = vmatpush2.bf16.msra.mxu0 %v1085
  %1416 = vmatprep.subr.bf16.mxu0 0
  %1417 = vmatpush2.bf16.msra.mxu0 %v1084
  %1418 = vmatprep.subr.bf16.mxu0 0
  %1419 = vmatpush2.bf16.msra.mxu0 %v1083
  %1420 = vmatprep.subr.bf16.mxu0 0
  %1421 = vmatpush2.bf16.msra.mxu0 %v1082
  %1422 = vmatprep.subr.bf16.mxu0 0
  %1423 = vmatpush2.bf16.msra.mxu0 %v1081
  %1424 = vmatprep.subr.bf16.mxu0 0
  %1425 = vmatpush2.bf16.msra.mxu0 %v1080
  %1426 = vmatprep.subr.bf16.mxu0 0
  %1427 = vmatpush2.bf16.msra.mxu0 %v1079
  %1428 = vmatprep.subr.bf16.mxu0 0
  %1429 = vmatpush2.bf16.msra.mxu0 %v1078
  %1430 = vmatprep.mubr.bf16.mxu0 %v359
  %1431 = vmatmul.mubr.bf16.gmra.mxu0 %v358
  %v1432 = vpop.f32.mrf.mxu0
  %v1433 = vadd.f32 %v1393, %v1432
  %v1434 = vpop.f32.mrf.mxu0
  %v1435 = vpop.f32.mrf.mxu0
  %v1436 = vpop.f32.mrf.mxu0
  %1437 = vdwg.mxu0
  %1438 = vmatprep.subr.bf16.mxu0 0
  %1439 = vmatpush1.bf16.msra.mxu0 %v1093
  %1440 = vmatprep.subr.bf16.mxu0 0
  %1441 = vmatpush1.bf16.msra.mxu0 %v1092
  %1442 = vmatprep.subr.bf16.mxu0 0
  %1443 = vmatpush1.bf16.msra.mxu0 %v1091
  %1444 = vmatprep.subr.bf16.mxu0 0
  %1445 = vmatpush1.bf16.msra.mxu0 %v1090
  %1446 = vmatprep.subr.bf16.mxu0 0
  %1447 = vmatpush1.bf16.msra.mxu0 %v1089
  %1448 = vmatprep.subr.bf16.mxu0 0
  %1449 = vmatpush1.bf16.msra.mxu0 %v1088
  %1450 = vmatprep.subr.bf16.mxu0 0
  %1451 = vmatpush1.bf16.msra.mxu0 %v1087
  %1452 = vmatprep.subr.bf16.mxu0 0
  %1453 = vmatpush1.bf16.msra.mxu0 %v1086
  %1454 = vmatprep.subr.bf16.mxu0 0
  %1455 = vmatpush2.bf16.msra.mxu0 0
  %1456 = vmatprep.subr.bf16.mxu0 0
  %1457 = vmatpush2.bf16.msra.mxu0 0
  %1458 = vmatprep.subr.bf16.mxu0 0
  %1459 = vmatpush2.bf16.msra.mxu0 0
  %1460 = vmatprep.subr.bf16.mxu0 0
  %1461 = vmatpush2.bf16.msra.mxu0 0
  %1462 = vmatprep.subr.bf16.mxu0 0
  %1463 = vmatpush2.bf16.msra.mxu0 0
  %1464 = vmatprep.subr.bf16.mxu0 0
  %1465 = vmatpush2.bf16.msra.mxu0 0
  %1466 = vmatprep.subr.bf16.mxu0 0
  %1467 = vmatpush2.bf16.msra.mxu0 0
  %1468 = vmatprep.subr.bf16.mxu0 0
  %1469 = vmatpush2.bf16.msra.mxu0 0
  %1470 = vmatprep.mubr.bf16.mxu0 0
  %1471 = vmatmul.mubr.bf16.gmra.mxu0 %v360
  %v1472 = vpop.f32.mrf.mxu0
  %v1473 = vadd.f32 %v1433, %v1472
  %v1474 = vpop.f32.mrf.mxu0
  %v1475 = vpop.f32.mrf.mxu0
  %v1476 = vpop.f32.mrf.mxu0
  %1477 = vdwg.mxu0
  %v1478 = vmax.f32 %v1473, 0.0
  %v1479 = vld [vmem:[%s3 + $0x1] sm:$0x1]
  %v1480 = vlaneseq
  %v1481 = vshrl.u32 %v1480, 7
  %v1482 = vsub.s32 0, %v1481
  %v1483 = vrot.slane %v1479, %v1482
  %v1484 = vmul.f32 %v1478, %v1483
  %vm1485 = vcmask 517120
  %v1486 = vsel %vm1485, %v1484, 0.0
  %1487 = vadd.xlane.f32.xlu0 %v1486
  %v1488 = vpop.xlane.xlu0 %1487
  %v1489 = vld [vmem:[%s3 + $0x2] sm:$0x1]
  %v1490 = vlaneseq
  %v1491 = vshrl.u32 %v1490, 7
  %v1492 = vsub.s32 0, %v1491
  %v1493 = vrot.slane %v1489, %v1492
  %v1494 = vadd.f32 %v1488, %v1493
  %vm1495 = vcmask 1024
  %1496 = vst.msk [vmem:[%s4] sm:$0x3] %vm1495, %v1494
  // Predicated region
  $region18: #{critic_forward.1} parent=0 // pred_check
    _
  $region19: #{critic_forward.1} parent=0 // pred_check_branch
    %1498 = sbr.rel (0) target = $region21
  $region20: #{critic_forward.1} parent=0 // pred_region
    _
  $region21: #{critic_forward.1} parent=0 // pred_fallthru
    _
  // Predicated region
  $region22: #{critic_forward.1} parent=0 // pred_check
    _
  $region23: #{critic_forward.1} parent=0 // pred_check_branch
    %1500 = sbr.rel (0) target = $region25
  $region24: #{critic_forward.1} parent=0 // pred_region
    _
  $region25: #{critic_forward.1} parent=0 // pred_fallthru
    _

</llo_original>
